<compile_context>
chip_gen: v5e
topology: v5e:2x2
jax: 0.10.0
libtpu: 0.0.40
codegen_flags: <defaults>
</compile_context>

<pallas_src>
import jax
import jax.numpy as jnp
from jax.experimental import pallas as pl
from jax.experimental.pallas import tpu as pltpu

NUM_CUES = 2
NUM_STIMULI = 4
HIDDEN_SIZE = 32
INPUT_SIZE = NUM_CUES + NUM_STIMULI

# Batch tile (lane dim).  The kernel only moves ~28 B/sample from HBM, so the
# ~0.35 us (~600-cycle) per-grid-step cost dominates unless tiles are big.
# Sweep: 32768-65536 on v5e/v6e, 16384-32768 on v7x (keep >=4-8 tiles so both
# TensorCores get work).  Even at tb=65536 the per-tile VMEM footprint is
# ~12 MiB (double-buffered (6,tb) input + (32,tb) f32 hidden + (1,tb) output),
# well under the 32 MiB scoped default, so no vmem_limit_bytes override needed.
DEFAULT_TB = 32768


def _mlp_kernel(x_ref, w1_ref, nb1_ref, w2_ref, b2_ref, o_ref):
    # x:   (INPUT_SIZE, TB)      w1: (HIDDEN, INPUT_SIZE)
    # nb1: (HIDDEN, 1)           w2: (1, HIDDEN)     b2: (1,) in SMEM
    # out: (1, TB)  -- lane-dense, unmasked vst
    z = jnp.dot(w1_ref[...], x_ref[...],
                preferred_element_type=jnp.float32,
                precision=jax.lax.Precision.HIGHEST)
    # relu(z + b1) = max(z, -b1) + b1; the "+ b1" commutes into the second
    # linear and is pre-folded into b2_eff -> epilogue is one full-vreg VPU max.
    h = jnp.maximum(z, nb1_ref[...])
    # TODO(synk): on v7x consider h = h.astype(jnp.bfloat16) here to halve the
    # (32, TB) hidden-tile VMEM traffic (skip on v5e: no bf16 VPU).
    score = jnp.dot(w2_ref[...], h,
                    preferred_element_type=jnp.float32,
                    precision=jax.lax.Precision.HIGHEST) + b2_ref[0]
    o_ref[...] = score.astype(o_ref.dtype)


def prepare_params(w1, b1, w2, b2):
    """One-time parameter prep: fc1 weight transposed, biases algebraically folded."""
    w1 = jnp.asarray(w1, jnp.float32)                     # (INPUT_SIZE, HIDDEN)
    b1 = jnp.asarray(b1, jnp.float32).reshape(HIDDEN_SIZE)
    w2 = jnp.asarray(w2, jnp.float32).reshape(HIDDEN_SIZE)
    b2 = jnp.asarray(b2, jnp.float32).reshape(())
    w1_t = w1.T                                           # (HIDDEN, INPUT_SIZE)
    neg_b1 = (-b1).reshape(HIDDEN_SIZE, 1)                # (HIDDEN, 1)
    w2_row = w2.reshape(1, HIDDEN_SIZE)                   # (1, HIDDEN)
    b2_eff = (jnp.dot(w2, b1, precision=jax.lax.Precision.HIGHEST) + b2).reshape(1)
    return w1_t, neg_b1, w2_row, b2_eff


def _forward_xt(x_t, params, *, tb):
    """Core call.  x_t: (INPUT_SIZE, B) batch-on-lanes input.  Returns (B, 1)."""
    w1_t, neg_b1, w2_row, b2_eff = params
    B = x_t.shape[1]
    # Lane tile must be a multiple of 128; shrink for small batches.  No
    # padding: the last block reads/writes OOB (reads are per-lane garbage that
    # never mixes with valid lanes; OOB output lanes are dropped).
    tb = max(128, min(tb, ((B + 127) // 128) * 128))
    n_tiles = pl.cdiv(B, tb)

    out = pl.pallas_call(
        _mlp_kernel,
        out_shape=jax.ShapeDtypeStruct((1, B), jnp.float32),
        grid=(n_tiles,),
        in_specs=[
            pl.BlockSpec((INPUT_SIZE, tb), lambda i: (0, i)),           # x tile
            pl.BlockSpec((HIDDEN_SIZE, INPUT_SIZE), lambda i: (0, 0)),  # w1 (resident)
            pl.BlockSpec((HIDDEN_SIZE, 1), lambda i: (0, 0)),           # -b1 (resident)
            pl.BlockSpec((1, HIDDEN_SIZE), lambda i: (0, 0)),           # w2 (resident)
            pl.BlockSpec(memory_space=pltpu.MemorySpace.SMEM),          # b2_eff scalar
        ],
        out_specs=pl.BlockSpec((1, tb), lambda i: (0, i)),              # lane-dense out
        compiler_params=pltpu.CompilerParams(
            # Batch tiles are independent -> megacore sharding on 2-TC parts.
            dimension_semantics=("parallel",),
        ),
    )(x_t, w1_t, neg_b1, w2_row, b2_eff)
    return out.T  # (B, 1)


def cue_stimulus_forward(cue_onehot, stim_onehot, params, *, tb=DEFAULT_TB):
    """Pallas CueStimulusNetwork.forward with the module's (B, n) one-hot signature.

    Args:
      cue_onehot:  (B, NUM_CUES)    float
      stim_onehot: (B, NUM_STIMULI) float
      params: output of prepare_params(w1, b1, w2, b2) with
              w1: (INPUT_SIZE, HIDDEN), b1: (HIDDEN,), w2: (HIDDEN, 1), b2: (1,)
    Returns:
      (B, 1) float32 scores.
    """
    # Single fused transpose+concat pass (no pad pass); the concat replaces
    # torch.cat and feeds one fused first-layer matmul in the kernel.
    x_t = jnp.concatenate(
        [jnp.asarray(cue_onehot, jnp.float32).T,
         jnp.asarray(stim_onehot, jnp.float32).T], axis=0)   # (INPUT_SIZE, B)
    return _forward_xt(x_t, params, tb=tb)


def cue_stimulus_forward_from_indices(cue_idx, stim_idx, params, *, tb=DEFAULT_TB):
    """HBM-lean entry point: builds the one-hots already transposed (no (B, n)
    intermediates, no wrapper transpose pass).  Same math as the module forward."""
    x_t = jnp.concatenate(
        [jax.nn.one_hot(cue_idx, NUM_CUES, axis=0, dtype=jnp.float32),
         jax.nn.one_hot(stim_idx, NUM_STIMULI, axis=0, dtype=jnp.float32)],
        axis=0)                                              # (INPUT_SIZE, B)
    return _forward_xt(x_t, params, tb=tb)


def init_params(key):
    """Deterministic init mirroring nn.Linear's default U(-1/sqrt(fan_in), +1/sqrt(fan_in))."""
    k1, k2, k3, k4 = jax.random.split(key, 4)
    bound1 = 1.0 / jnp.sqrt(jnp.float32(INPUT_SIZE))
    bound2 = 1.0 / jnp.sqrt(jnp.float32(HIDDEN_SIZE))
    w1 = jax.random.uniform(k1, (INPUT_SIZE, HIDDEN_SIZE), jnp.float32, -bound1, bound1)
    b1 = jax.random.uniform(k2, (HIDDEN_SIZE,), jnp.float32, -bound1, bound1)
    w2 = jax.random.uniform(k3, (HIDDEN_SIZE, 1), jnp.float32, -bound2, bound2)
    b2 = jax.random.uniform(k4, (1,), jnp.float32, -bound2, bound2)
    return w1, b1, w2, b2


def _reference(cue_onehot, stim_onehot, w1, b1, w2, b2):
    x = jnp.concatenate([cue_onehot, stim_onehot], axis=1)
    h = jnp.maximum(jnp.dot(x, w1, precision=jax.lax.Precision.HIGHEST) + b1, 0.0)
    return jnp.dot(h, w2, precision=jax.lax.Precision.HIGHEST) + b2


if __name__ == "__main__":
    key = jax.random.PRNGKey(0)
    pkey, ckey, skey = jax.random.split(key, 3)

    w1, b1, w2, b2 = init_params(pkey)
    params = prepare_params(w1, b1, w2, b2)

    # --- small batch, module-signature (B, n) one-hot inputs ---
    batch = 8
    cue_idx = jax.random.randint(ckey, (batch,), 0, NUM_CUES)
    stim_idx = jax.random.randint(skey, (batch,), 0, NUM_STIMULI)
    cue_onehot = jax.nn.one_hot(cue_idx, NUM_CUES, dtype=jnp.float32)
    stim_onehot = jax.nn.one_hot(stim_idx, NUM_STIMULI, dtype=jnp.float32)

    score = jax.block_until_ready(cue_stimulus_forward(cue_onehot, stim_onehot, params))
    ref = _reference(cue_onehot, stim_onehot, w1, b1, w2, b2)
    assert score.shape == (batch, 1)
    assert jnp.allclose(score, ref, atol=1e-4, rtol=1e-4)

    # --- multi-tile grid + batch not a multiple of the lane tile ---
    # (exercises the unpadded OOB last block and the batch grid axis)
    batch2 = 300
    ck2, sk2 = jax.random.split(jax.random.PRNGKey(1))
    cue_idx2 = jax.random.randint(ck2, (batch2,), 0, NUM_CUES)
    stim_idx2 = jax.random.randint(sk2, (batch2,), 0, NUM_STIMULI)
    cue2 = jax.nn.one_hot(cue_idx2, NUM_CUES, dtype=jnp.float32)
    stim2 = jax.nn.one_hot(stim_idx2, NUM_STIMULI, dtype=jnp.float32)

    score2 = jax.block_until_ready(cue_stimulus_forward(cue2, stim2, params, tb=128))
    ref2 = _reference(cue2, stim2, w1, b1, w2, b2)
    assert score2.shape == (batch2, 1)
    assert jnp.allclose(score2, ref2, atol=1e-4, rtol=1e-4)

    # --- HBM-lean index entry point (one-hots built already transposed) ---
    score3 = jax.block_until_ready(
        cue_stimulus_forward_from_indices(cue_idx2, stim_idx2, params, tb=128))
    assert jnp.allclose(score3, ref2, atol=1e-4, rtol=1e-4)

    print("KERNEL_OK")
</pallas_src>

<mosaic_0001>
module attributes {stable_mosaic.version = 11 : i64} {
  func.func @_mlp_kernel(%arg0: i32, %arg1: memref<6x128xf32, #tpu.memory_space<vmem>>, %arg2: memref<32x6xf32, #tpu.memory_space<vmem>>, %arg3: memref<32x1xf32, #tpu.memory_space<vmem>>, %arg4: memref<1x32xf32, #tpu.memory_space<vmem>>, %arg5: memref<1xf32, #tpu.memory_space<smem>>, %arg6: memref<1x128xf32, #tpu.memory_space<vmem>>) attributes {dimension_semantics = [#tpu.dimension_semantics<parallel>], iteration_bounds = array<i64: 1>, scalar_prefetch = 0 : i64, scratch_operands = 0 : i64, tpu.core_type = #tpu.core_type<tc>, window_params = [{transform_indices = @transform_0, window_bounds = array<i64: 6, 128>}, {pipeline_mode = #tpu.pipeline_mode<synchronous>, transform_indices = @transform_1, window_bounds = array<i64: 32, 6>}, {pipeline_mode = #tpu.pipeline_mode<synchronous>, transform_indices = @transform_2, window_bounds = array<i64: 32, 1>}, {pipeline_mode = #tpu.pipeline_mode<synchronous>, transform_indices = @transform_3, window_bounds = array<i64: 1, 32>}, {transform_indices = @transform_4, window_bounds = array<i64: 1>}, {transform_indices = @transform_5, window_bounds = array<i64: 1, 128>}]} {
    %c0 = arith.constant 0 : index
    %c0_0 = arith.constant 0 : index
    %0 = vector.load %arg2[%c0, %c0_0] : memref<32x6xf32, #tpu.memory_space<vmem>>, vector<32x6xf32>
    %c0_1 = arith.constant 0 : index
    %c0_2 = arith.constant 0 : index
    %1 = vector.load %arg1[%c0_1, %c0_2] : memref<6x128xf32, #tpu.memory_space<vmem>>, vector<6x128xf32>
    %cst = arith.constant dense<0.000000e+00> : vector<32x128xf32>
    %2 = tpu.matmul %0, %1, %cst {dimension_numbers = #tpu.dot_dimension_numbers<[1], [0], [0], [1], [0, 0, 1, 1], [], []>, precision = #tpu.contract_precision<fp32>} : vector<32x6xf32>, vector<6x128xf32>, vector<32x128xf32> -> vector<32x128xf32>
    %c0_3 = arith.constant 0 : index
    %c0_4 = arith.constant 0 : index
    %3 = vector.load %arg3[%c0_3, %c0_4] : memref<32x1xf32, #tpu.memory_space<vmem>>, vector<32x1xf32>
    %4 = vector.broadcast %3 : vector<32x1xf32> to vector<32x128xf32>
    %5 = arith.maximumf %2, %4 : vector<32x128xf32>
    %c0_5 = arith.constant 0 : index
    %c0_6 = arith.constant 0 : index
    %6 = vector.load %arg4[%c0_5, %c0_6] : memref<1x32xf32, #tpu.memory_space<vmem>>, vector<1x32xf32>
    %cst_7 = arith.constant dense<0.000000e+00> : vector<1x128xf32>
    %7 = tpu.matmul %6, %5, %cst_7 {dimension_numbers = #tpu.dot_dimension_numbers<[1], [0], [0], [1], [0, 0, 1, 1], [], []>, precision = #tpu.contract_precision<fp32>} : vector<1x32xf32>, vector<32x128xf32>, vector<1x128xf32> -> vector<1x128xf32>
    %c0_8 = arith.constant 0 : index
    %8 = memref.load %arg5[%c0_8] : memref<1xf32, #tpu.memory_space<smem>>
    %9 = vector.broadcast %8 : f32 to vector<1x128xf32>
    %10 = arith.addf %7, %9 : vector<1x128xf32>
    %c0_9 = arith.constant 0 : index
    %c0_10 = arith.constant 0 : index
    %11 = vector.load %arg6[%c0_9, %c0_10] : memref<1x128xf32, #tpu.memory_space<vmem>>, vector<1x128xf32>
    tpu.vector_store %arg6[%c0_9, %c0_10], %10 {strides = array<i32>} : memref<1x128xf32, #tpu.memory_space<vmem>>, vector<1x128xf32>,
    return
  }
  func.func @transform_0(%arg0: i32) -> (i32, i32) {
    %c0_i32 = arith.constant 0 : i32
    %c0_i32_0 = arith.constant 0 : i32
    return %c0_i32, %arg0 : i32, i32
  }
  func.func @transform_1(%arg0: i32) -> (i32, i32) {
    %c0_i32 = arith.constant 0 : i32
    %c0_i32_0 = arith.constant 0 : i32
    %c0_i32_1 = arith.constant 0 : i32
    return %c0_i32, %c0_i32_0 : i32, i32
  }
  func.func @transform_2(%arg0: i32) -> (i32, i32) {
    %c0_i32 = arith.constant 0 : i32
    %c0_i32_0 = arith.constant 0 : i32
    %c0_i32_1 = arith.constant 0 : i32
    return %c0_i32, %c0_i32_0 : i32, i32
  }
  func.func @transform_3(%arg0: i32) -> (i32, i32) {
    %c0_i32 = arith.constant 0 : i32
    %c0_i32_0 = arith.constant 0 : i32
    %c0_i32_1 = arith.constant 0 : i32
    return %c0_i32, %c0_i32_0 : i32, i32
  }
  func.func @transform_4(%arg0: i32) -> i32 {
    %c0_i32 = arith.constant 0 : i32
    %c0_i32_0 = arith.constant 0 : i32
    return %c0_i32 : i32
  }
  func.func @transform_5(%arg0: i32) -> (i32, i32) {
    %c0_i32 = arith.constant 0 : i32
    %c0_i32_0 = arith.constant 0 : i32
    return %c0_i32, %arg0 : i32, i32
  }
}

</mosaic_0001>

<llo_original>
// kernel: tpu_custom_call.1
$region0: #{tpu_custom_call.1}
  #allocation0 [shape = 'u32[]', space=smem, size = 0x4, offset = 0x4, fixed_abs, tag = 'smem constant byte address 0x4 - core index']
  #allocation1 [shape = 'u32[72,128]{1,0:T(1,128)}', space=vmem, size = 0x9000, scoped, tag = 'internal scratch']
  #allocation2 [shape = 'f32[1]{0:T(128)S(6)}', space=smem, size = 0x200, scoped, tag = 'scoped memory for tpu_custom_call.1']
  %s0 = inlined_call_operand.vmem [shape: f32[6,8], index: 0, kind: input, shape index: {}]
  %s1 = inlined_call_operand.vmem [shape: f32[32,6], index: 1, kind: input, shape index: {}]
  %s2 = inlined_call_operand.vmem [shape: f32[32,1], index: 2, kind: input, shape index: {}]
  %s3 = inlined_call_operand.vmem [shape: f32[1,32], index: 3, kind: input, shape index: {}]
  %s4 = inlined_call_operand.<no memory space> [shape: f32[1], index: 4, kind: input, shape index: {}]
  %s5 = inlined_call_operand.hbm [shape: f32[1,8], index: 5, kind: output, shape index: {}]
  %s6 = sld [smem:[#allocation0]]
  $region30: #{tpu_custom_call.1} parent=0
    _
  %s8 = ssub.s32 1, %s6
  %s9 = scalar_select 0, %s8, %s6
  %10 = sst [smem:[#allocation2]] %s4
  $region1: #{tpu_custom_call.1} parent=0
    #allocation3 [shape = 'u8[512]{0}', space=vmem, size = 0x400, scoped, tag = 'output window, operand 0, single buffered']
    #allocation4 [shape = 's32[1]{0}', space=sflag, size = 0x4, scoped, tag = 'scoped memory for tpu_custom_call.1']
    %11 = vsyncpa [#allocation4], 0
    // Predicated region
    $region2: #{tpu_custom_call.1} parent=1 // pred_check
      _
    $region3: #{tpu_custom_call.1} parent=1 // pred_check_branch
      %13 = sbr.rel (0) target = $region5
    $region4: #{tpu_custom_call.1} parent=1 // pred_region
      _
    $region5: #{tpu_custom_call.1} parent=1 // pred_fallthru
      _
    // Predicated region
    $region6: #{tpu_custom_call.1} parent=1 // pred_check
      _
    $region7: #{tpu_custom_call.1} parent=1 // pred_check_branch
      %15 = sbr.rel (0) target = $region9
    $region8: #{tpu_custom_call.1} parent=1 // pred_region
      _
    $region9: #{tpu_custom_call.1} parent=1 // pred_fallthru
      _
    // Predicated region
    $region10: #{tpu_custom_call.1} parent=1 // pred_check
      _
    $region11: #{tpu_custom_call.1} parent=1 // pred_check_branch
      %17 = sbr.rel (0) target = $region13
    $region12: #{tpu_custom_call.1} parent=1 // pred_region
      _
    $region13: #{tpu_custom_call.1} parent=1 // pred_fallthru
      _
    // Predicated region
    $region14: #{tpu_custom_call.1} parent=1 // pred_check
      _
    $region15: #{tpu_custom_call.1} parent=1 // pred_check_branch
      %19 = sbr.rel (0) target = $region17
    $region16: #{tpu_custom_call.1} parent=1 // pred_region
      _
    $region17: #{tpu_custom_call.1} parent=1 // pred_fallthru
      _
    // Predicated region
    $region18: #{tpu_custom_call.1} parent=1 // pred_check
      _
    $region19: #{tpu_custom_call.1} parent=1 // pred_check_branch
      %21 = sbr.rel (0) target = $region21
    $region20: #{tpu_custom_call.1} parent=1 // pred_region
      _
    $region21: #{tpu_custom_call.1} parent=1 // pred_fallthru
      _
    %v22 = vld [vmem:[%s1] sm:$0xff]
    %v23 = vld [vmem:[%s1 + $0x8] sm:$0xff]
    %v24 = vld [vmem:[%s1 + $0x10] sm:$0xff]
    %v25 = vld [vmem:[%s1 + $0x18] sm:$0xff]
    %v26 = vld [vmem:[%s0] sm:$0x3f]
    %vm27 = vcmask 48128
    %v29 = vsel %vm27, %v22, 0
    %v32 = vsel %vm27, %v23, 0
    %v35 = vsel %vm27, %v24, 0
    %v38 = vsel %vm27, %v25, 0
    %vm40 = vcmask 1045504
    %v42 = vsel %vm40, %v26, 0
    %44 = vmatpush.msra.mxu0 0.0
    %45 = vmatpush.msra.mxu0 0.0
    %46 = vmatpush.msra.mxu0 0.0
    %47 = vmatpush.msra.mxu0 0.0
    %48 = vmatpush.msra.mxu0 0.0
    %49 = vmatpush.msra.mxu0 0.0
    %50 = vmatpush.msra.mxu0 0.0
    %51 = vmatpush.msra.mxu0 0.0
    %52 = vmatpush.msra.mxu0 0.0
    %53 = vmatpush.msra.mxu0 0.0
    %54 = vmatpush.msra.mxu0 0.0
    %55 = vmatpush.msra.mxu0 0.0
    %56 = vmatpush.msra.mxu0 0.0
    %57 = vmatpush.msra.mxu0 0.0
    %58 = vmatpush.msra.mxu0 0.0
    %v59 = vand.u32 %v42, 4294901760
    %60 = vmatpush.msra.mxu0 %v59
    %v61 = vand.u32 %v29, 4294901760
    %v62 = vsub.f32 %v29, %v61
    %v63 = vand.u32 %v62, 4294901760
    %v64 = vsub.f32 %v62, %v63
    %v65 = vand.u32 %v64, 4294901760
    %66 = vmatmul.f32.gmra.mxu0 %v65
    %v67 = vpop.f32.mrf.mxu0
    %v68 = vadd.f32 0.0, %v67
    %v69 = vand.u32 %v32, 4294901760
    %v70 = vsub.f32 %v32, %v69
    %v71 = vand.u32 %v70, 4294901760
    %v72 = vsub.f32 %v70, %v71
    %v73 = vand.u32 %v72, 4294901760
    %74 = vmatmul.f32.gmra.mxu0 %v73
    %v75 = vpop.f32.mrf.mxu0
    %v76 = vadd.f32 0.0, %v75
    %v77 = vand.u32 %v35, 4294901760
    %v78 = vsub.f32 %v35, %v77
    %v79 = vand.u32 %v78, 4294901760
    %v80 = vsub.f32 %v78, %v79
    %v81 = vand.u32 %v80, 4294901760
    %82 = vmatmul.f32.gmra.mxu0 %v81
    %v83 = vpop.f32.mrf.mxu0
    %v84 = vadd.f32 0.0, %v83
    %v85 = vand.u32 %v38, 4294901760
    %v86 = vsub.f32 %v38, %v85
    %v87 = vand.u32 %v86, 4294901760
    %v88 = vsub.f32 %v86, %v87
    %v89 = vand.u32 %v88, 4294901760
    %90 = vmatmul.f32.gmra.mxu0 %v89
    %v91 = vpop.f32.mrf.mxu0
    %v92 = vadd.f32 0.0, %v91
    %93 = vdwg.mxu0
    %94 = vmatpush.msra.mxu0 0.0
    %95 = vmatpush.msra.mxu0 0.0
    %96 = vmatpush.msra.mxu0 0.0
    %97 = vmatpush.msra.mxu0 0.0
    %98 = vmatpush.msra.mxu0 0.0
    %99 = vmatpush.msra.mxu0 0.0
    %100 = vmatpush.msra.mxu0 0.0
    %101 = vmatpush.msra.mxu0 0.0
    %102 = vmatpush.msra.mxu0 0.0
    %103 = vmatpush.msra.mxu0 0.0
    %104 = vmatpush.msra.mxu0 0.0
    %105 = vmatpush.msra.mxu0 0.0
    %106 = vmatpush.msra.mxu0 0.0
    %107 = vmatpush.msra.mxu0 0.0
    %108 = vmatpush.msra.mxu0 0.0
    %v109 = vand.u32 %v42, 4294901760
    %v110 = vsub.f32 %v42, %v109
    %v111 = vand.u32 %v110, 4294901760
    %v112 = vsub.f32 %v110, %v111
    %v113 = vand.u32 %v112, 4294901760
    %114 = vmatpush.msra.mxu0 %v113
    %v115 = vand.u32 %v29, 4294901760
    %116 = vmatmul.f32.gmra.mxu0 %v115
    %v117 = vpop.f32.mrf.mxu0
    %v118 = vadd.f32 %v68, %v117
    %v119 = vand.u32 %v32, 4294901760
    %120 = vmatmul.f32.gmra.mxu0 %v119
    %v121 = vpop.f32.mrf.mxu0
    %v122 = vadd.f32 %v76, %v121
    %v123 = vand.u32 %v35, 4294901760
    %124 = vmatmul.f32.gmra.mxu0 %v123
    %v125 = vpop.f32.mrf.mxu0
    %v126 = vadd.f32 %v84, %v125
    %v127 = vand.u32 %v38, 4294901760
    %128 = vmatmul.f32.gmra.mxu0 %v127
    %v129 = vpop.f32.mrf.mxu0
    %v130 = vadd.f32 %v92, %v129
    %131 = vdwg.mxu0
    %132 = vmatpush.msra.mxu0 0.0
    %133 = vmatpush.msra.mxu0 0.0
    %134 = vmatpush.msra.mxu0 0.0
    %135 = vmatpush.msra.mxu0 0.0
    %136 = vmatpush.msra.mxu0 0.0
    %137 = vmatpush.msra.mxu0 0.0
    %138 = vmatpush.msra.mxu0 0.0
    %139 = vmatpush.msra.mxu0 0.0
    %140 = vmatpush.msra.mxu0 0.0
    %141 = vmatpush.msra.mxu0 0.0
    %142 = vmatpush.msra.mxu0 0.0
    %143 = vmatpush.msra.mxu0 0.0
    %144 = vmatpush.msra.mxu0 0.0
    %145 = vmatpush.msra.mxu0 0.0
    %146 = vmatpush.msra.mxu0 0.0
    %v147 = vand.u32 %v42, 4294901760
    %v148 = vsub.f32 %v42, %v147
    %149 = vmatpush.msra.mxu0 %v148
    %v150 = vand.u32 %v29, 4294901760
    %v151 = vsub.f32 %v29, %v150
    %152 = vmatmul.f32.gmra.mxu0 %v151
    %v153 = vpop.f32.mrf.mxu0
    %v154 = vadd.f32 %v118, %v153
    %v155 = vand.u32 %v32, 4294901760
    %v156 = vsub.f32 %v32, %v155
    %157 = vmatmul.f32.gmra.mxu0 %v156
    %v158 = vpop.f32.mrf.mxu0
    %v159 = vadd.f32 %v122, %v158
    %v160 = vand.u32 %v35, 4294901760
    %v161 = vsub.f32 %v35, %v160
    %162 = vmatmul.f32.gmra.mxu0 %v161
    %v163 = vpop.f32.mrf.mxu0
    %v164 = vadd.f32 %v126, %v163
    %v165 = vand.u32 %v38, 4294901760
    %v166 = vsub.f32 %v38, %v165
    %167 = vmatmul.f32.gmra.mxu0 %v166
    %v168 = vpop.f32.mrf.mxu0
    %v169 = vadd.f32 %v130, %v168
    %170 = vdwg.mxu0
    %171 = vmatpush.msra.mxu0 0.0
    %172 = vmatpush.msra.mxu0 0.0
    %173 = vmatpush.msra.mxu0 0.0
    %174 = vmatpush.msra.mxu0 0.0
    %175 = vmatpush.msra.mxu0 0.0
    %176 = vmatpush.msra.mxu0 0.0
    %177 = vmatpush.msra.mxu0 0.0
    %178 = vmatpush.msra.mxu0 0.0
    %179 = vmatpush.msra.mxu0 0.0
    %180 = vmatpush.msra.mxu0 0.0
    %181 = vmatpush.msra.mxu0 0.0
    %182 = vmatpush.msra.mxu0 0.0
    %183 = vmatpush.msra.mxu0 0.0
    %184 = vmatpush.msra.mxu0 0.0
    %185 = vmatpush.msra.mxu0 0.0
    %v186 = vand.u32 %v42, 4294901760
    %187 = vmatpush.msra.mxu0 %v186
    %v188 = vand.u32 %v29, 4294901760
    %v189 = vsub.f32 %v29, %v188
    %v190 = vand.u32 %v189, 4294901760
    %191 = vmatmul.f32.gmra.mxu0 %v190
    %v192 = vpop.f32.mrf.mxu0
    %v193 = vadd.f32 %v154, %v192
    %v194 = vand.u32 %v32, 4294901760
    %v195 = vsub.f32 %v32, %v194
    %v196 = vand.u32 %v195, 4294901760
    %197 = vmatmul.f32.gmra.mxu0 %v196
    %v198 = vpop.f32.mrf.mxu0
    %v199 = vadd.f32 %v159, %v198
    %v200 = vand.u32 %v35, 4294901760
    %v201 = vsub.f32 %v35, %v200
    %v202 = vand.u32 %v201, 4294901760
    %203 = vmatmul.f32.gmra.mxu0 %v202
    %v204 = vpop.f32.mrf.mxu0
    %v205 = vadd.f32 %v164, %v204
    %v206 = vand.u32 %v38, 4294901760
    %v207 = vsub.f32 %v38, %v206
    %v208 = vand.u32 %v207, 4294901760
    %209 = vmatmul.f32.gmra.mxu0 %v208
    %v210 = vpop.f32.mrf.mxu0
    %v211 = vadd.f32 %v169, %v210
    %212 = vdwg.mxu0
    %213 = vmatpush.msra.mxu0 0.0
    %214 = vmatpush.msra.mxu0 0.0
    %215 = vmatpush.msra.mxu0 0.0
    %216 = vmatpush.msra.mxu0 0.0
    %217 = vmatpush.msra.mxu0 0.0
    %218 = vmatpush.msra.mxu0 0.0
    %219 = vmatpush.msra.mxu0 0.0
    %220 = vmatpush.msra.mxu0 0.0
    %221 = vmatpush.msra.mxu0 0.0
    %222 = vmatpush.msra.mxu0 0.0
    %223 = vmatpush.msra.mxu0 0.0
    %224 = vmatpush.msra.mxu0 0.0
    %225 = vmatpush.msra.mxu0 0.0
    %226 = vmatpush.msra.mxu0 0.0
    %227 = vmatpush.msra.mxu0 0.0
    %v228 = vand.u32 %v42, 4294901760
    %v229 = vsub.f32 %v42, %v228
    %v230 = vand.u32 %v229, 4294901760
    %231 = vmatpush.msra.mxu0 %v230
    %v232 = vand.u32 %v29, 4294901760
    %233 = vmatmul.f32.gmra.mxu0 %v232
    %v234 = vpop.f32.mrf.mxu0
    %v235 = vadd.f32 %v193, %v234
    %v236 = vand.u32 %v32, 4294901760
    %237 = vmatmul.f32.gmra.mxu0 %v236
    %v238 = vpop.f32.mrf.mxu0
    %v239 = vadd.f32 %v199, %v238
    %v240 = vand.u32 %v35, 4294901760
    %241 = vmatmul.f32.gmra.mxu0 %v240
    %v242 = vpop.f32.mrf.mxu0
    %v243 = vadd.f32 %v205, %v242
    %v244 = vand.u32 %v38, 4294901760
    %245 = vmatmul.f32.gmra.mxu0 %v244
    %v246 = vpop.f32.mrf.mxu0
    %v247 = vadd.f32 %v211, %v246
    %248 = vdwg.mxu0
    %249 = vmatpush.msra.mxu0 0.0
    %250 = vmatpush.msra.mxu0 0.0
    %251 = vmatpush.msra.mxu0 0.0
    %252 = vmatpush.msra.mxu0 0.0
    %253 = vmatpush.msra.mxu0 0.0
    %254 = vmatpush.msra.mxu0 0.0
    %255 = vmatpush.msra.mxu0 0.0
    %256 = vmatpush.msra.mxu0 0.0
    %257 = vmatpush.msra.mxu0 0.0
    %258 = vmatpush.msra.mxu0 0.0
    %259 = vmatpush.msra.mxu0 0.0
    %260 = vmatpush.msra.mxu0 0.0
    %261 = vmatpush.msra.mxu0 0.0
    %262 = vmatpush.msra.mxu0 0.0
    %263 = vmatpush.msra.mxu0 0.0
    %v264 = vand.u32 %v42, 4294901760
    %265 = vmatpush.msra.mxu0 %v264
    %v266 = vand.u32 %v29, 4294901760
    %267 = vmatmul.f32.gmra.mxu0 %v266
    %v268 = vpop.f32.mrf.mxu0
    %v269 = vadd.f32 %v235, %v268
    %v270 = vand.u32 %v32, 4294901760
    %271 = vmatmul.f32.gmra.mxu0 %v270
    %v272 = vpop.f32.mrf.mxu0
    %v273 = vadd.f32 %v239, %v272
    %v274 = vand.u32 %v35, 4294901760
    %275 = vmatmul.f32.gmra.mxu0 %v274
    %v276 = vpop.f32.mrf.mxu0
    %v277 = vadd.f32 %v243, %v276
    %v278 = vand.u32 %v38, 4294901760
    %279 = vmatmul.f32.gmra.mxu0 %v278
    %v280 = vpop.f32.mrf.mxu0
    %v281 = vadd.f32 %v247, %v280
    %282 = vdwg.mxu0
    %v283 = vld [vmem:[%s2] sm:$0xff]
    %v284 = vld [vmem:[%s2 + $0x8] sm:$0xff]
    %v285 = vld [vmem:[%s2 + $0x10] sm:$0xff]
    %v286 = vld [vmem:[%s2 + $0x18] sm:$0xff]
    %288 = vset.pattern.permute.xlu0 0
    %289 = vperm.xlu0 %288, %v283
    %v290 = vpop.permute.xlu0 %289
    %293 = vset.pattern.permute.xlu0 0
    %294 = vperm.xlu0 %293, %v284
    %v295 = vpop.permute.xlu0 %294
    %298 = vset.pattern.permute.xlu0 0
    %299 = vperm.xlu0 %298, %v285
    %v300 = vpop.permute.xlu0 %299
    %303 = vset.pattern.permute.xlu0 0
    %304 = vperm.xlu0 %303, %v286
    %v305 = vpop.permute.xlu0 %304
    %v307 = vmax.f32 %v269, %v290
    %v308 = vmax.f32 %v273, %v295
    %v309 = vmax.f32 %v277, %v300
    %v310 = vmax.f32 %v281, %v305
    %v311 = vld [vmem:[%s3] sm:$0x1]
    %s312 = sld [smem:[#allocation2]]
    %v313 = vstv %s312
    %vm314 = vcmask 261120
    %v316 = vsel %vm314, %v311, 0
    %318 = vmatpush.msra.mxu0 0.0
    %319 = vmatpush.msra.mxu0 0.0
    %320 = vmatpush.msra.mxu0 0.0
    %321 = vmatpush.msra.mxu0 0.0
    %322 = vmatpush.msra.mxu0 0.0
    %323 = vmatpush.msra.mxu0 0.0
    %324 = vmatpush.msra.mxu0 0.0
    %325 = vmatpush.msra.mxu0 0.0
    %326 = vmatpush.msra.mxu0 0.0
    %327 = vmatpush.msra.mxu0 0.0
    %328 = vmatpush.msra.mxu0 0.0
    %329 = vmatpush.msra.mxu0 0.0
    %v330 = vand.u32 %v310, 4294901760
    %331 = vmatpush.msra.mxu0 %v330
    %v332 = vand.u32 %v309, 4294901760
    %333 = vmatpush.msra.mxu0 %v332
    %v334 = vand.u32 %v308, 4294901760
    %335 = vmatpush.msra.mxu0 %v334
    %v336 = vand.u32 %v307, 4294901760
    %337 = vmatpush.msra.mxu0 %v336
    %v338 = vand.u32 %v316, 4294901760
    %v339 = vsub.f32 %v316, %v338
    %v340 = vand.u32 %v339, 4294901760
    %v341 = vsub.f32 %v339, %v340
    %v342 = vand.u32 %v341, 4294901760
    %343 = vmatmul.f32.gmra.mxu0 %v342
    %v344 = vpop.f32.mrf.mxu0
    %v345 = vadd.f32 %v313, %v344
    %346 = vdwg.mxu0
    %347 = vmatpush.msra.mxu0 0.0
    %348 = vmatpush.msra.mxu0 0.0
    %349 = vmatpush.msra.mxu0 0.0
    %350 = vmatpush.msra.mxu0 0.0
    %351 = vmatpush.msra.mxu0 0.0
    %352 = vmatpush.msra.mxu0 0.0
    %353 = vmatpush.msra.mxu0 0.0
    %354 = vmatpush.msra.mxu0 0.0
    %355 = vmatpush.msra.mxu0 0.0
    %356 = vmatpush.msra.mxu0 0.0
    %357 = vmatpush.msra.mxu0 0.0
    %358 = vmatpush.msra.mxu0 0.0
    %v359 = vand.u32 %v310, 4294901760
    %v360 = vsub.f32 %v310, %v359
    %v361 = vand.u32 %v360, 4294901760
    %v362 = vsub.f32 %v360, %v361
    %v363 = vand.u32 %v362, 4294901760
    %364 = vmatpush.msra.mxu0 %v363
    %v365 = vand.u32 %v309, 4294901760
    %v366 = vsub.f32 %v309, %v365
    %v367 = vand.u32 %v366, 4294901760
    %v368 = vsub.f32 %v366, %v367
    %v369 = vand.u32 %v368, 4294901760
    %370 = vmatpush.msra.mxu0 %v369
    %v371 = vand.u32 %v308, 4294901760
    %v372 = vsub.f32 %v308, %v371
    %v373 = vand.u32 %v372, 4294901760
    %v374 = vsub.f32 %v372, %v373
    %v375 = vand.u32 %v374, 4294901760
    %376 = vmatpush.msra.mxu0 %v375
    %v377 = vand.u32 %v307, 4294901760
    %v378 = vsub.f32 %v307, %v377
    %v379 = vand.u32 %v378, 4294901760
    %v380 = vsub.f32 %v378, %v379
    %v381 = vand.u32 %v380, 4294901760
    %382 = vmatpush.msra.mxu0 %v381
    %v383 = vand.u32 %v316, 4294901760
    %384 = vmatmul.f32.gmra.mxu0 %v383
    %v385 = vpop.f32.mrf.mxu0
    %v386 = vadd.f32 %v345, %v385
    %387 = vdwg.mxu0
    %388 = vmatpush.msra.mxu0 0.0
    %389 = vmatpush.msra.mxu0 0.0
    %390 = vmatpush.msra.mxu0 0.0
    %391 = vmatpush.msra.mxu0 0.0
    %392 = vmatpush.msra.mxu0 0.0
    %393 = vmatpush.msra.mxu0 0.0
    %394 = vmatpush.msra.mxu0 0.0
    %395 = vmatpush.msra.mxu0 0.0
    %396 = vmatpush.msra.mxu0 0.0
    %397 = vmatpush.msra.mxu0 0.0
    %398 = vmatpush.msra.mxu0 0.0
    %399 = vmatpush.msra.mxu0 0.0
    %v400 = vand.u32 %v310, 4294901760
    %v401 = vsub.f32 %v310, %v400
    %402 = vmatpush.msra.mxu0 %v401
    %v403 = vand.u32 %v309, 4294901760
    %v404 = vsub.f32 %v309, %v403
    %405 = vmatpush.msra.mxu0 %v404
    %v406 = vand.u32 %v308, 4294901760
    %v407 = vsub.f32 %v308, %v406
    %408 = vmatpush.msra.mxu0 %v407
    %v409 = vand.u32 %v307, 4294901760
    %v410 = vsub.f32 %v307, %v409
    %411 = vmatpush.msra.mxu0 %v410
    %v412 = vand.u32 %v316, 4294901760
    %v413 = vsub.f32 %v316, %v412
    %414 = vmatmul.f32.gmra.mxu0 %v413
    %v415 = vpop.f32.mrf.mxu0
    %v416 = vadd.f32 %v386, %v415
    %417 = vdwg.mxu0
    %418 = vmatpush.msra.mxu0 0.0
    %419 = vmatpush.msra.mxu0 0.0
    %420 = vmatpush.msra.mxu0 0.0
    %421 = vmatpush.msra.mxu0 0.0
    %422 = vmatpush.msra.mxu0 0.0
    %423 = vmatpush.msra.mxu0 0.0
    %424 = vmatpush.msra.mxu0 0.0
    %425 = vmatpush.msra.mxu0 0.0
    %426 = vmatpush.msra.mxu0 0.0
    %427 = vmatpush.msra.mxu0 0.0
    %428 = vmatpush.msra.mxu0 0.0
    %429 = vmatpush.msra.mxu0 0.0
    %v430 = vand.u32 %v310, 4294901760
    %431 = vmatpush.msra.mxu0 %v430
    %v432 = vand.u32 %v309, 4294901760
    %433 = vmatpush.msra.mxu0 %v432
    %v434 = vand.u32 %v308, 4294901760
    %435 = vmatpush.msra.mxu0 %v434
    %v436 = vand.u32 %v307, 4294901760
    %437 = vmatpush.msra.mxu0 %v436
    %v438 = vand.u32 %v316, 4294901760
    %v439 = vsub.f32 %v316, %v438
    %v440 = vand.u32 %v439, 4294901760
    %441 = vmatmul.f32.gmra.mxu0 %v440
    %v442 = vpop.f32.mrf.mxu0
    %v443 = vadd.f32 %v416, %v442
    %444 = vdwg.mxu0
    %445 = vmatpush.msra.mxu0 0.0
    %446 = vmatpush.msra.mxu0 0.0
    %447 = vmatpush.msra.mxu0 0.0
    %448 = vmatpush.msra.mxu0 0.0
    %449 = vmatpush.msra.mxu0 0.0
    %450 = vmatpush.msra.mxu0 0.0
    %451 = vmatpush.msra.mxu0 0.0
    %452 = vmatpush.msra.mxu0 0.0
    %453 = vmatpush.msra.mxu0 0.0
    %454 = vmatpush.msra.mxu0 0.0
    %455 = vmatpush.msra.mxu0 0.0
    %456 = vmatpush.msra.mxu0 0.0
    %v457 = vand.u32 %v310, 4294901760
    %v458 = vsub.f32 %v310, %v457
    %v459 = vand.u32 %v458, 4294901760
    %460 = vmatpush.msra.mxu0 %v459
    %v461 = vand.u32 %v309, 4294901760
    %v462 = vsub.f32 %v309, %v461
    %v463 = vand.u32 %v462, 4294901760
    %464 = vmatpush.msra.mxu0 %v463
    %v465 = vand.u32 %v308, 4294901760
    %v466 = vsub.f32 %v308, %v465
    %v467 = vand.u32 %v466, 4294901760
    %468 = vmatpush.msra.mxu0 %v467
    %v469 = vand.u32 %v307, 4294901760
    %v470 = vsub.f32 %v307, %v469
    %v471 = vand.u32 %v470, 4294901760
    %472 = vmatpush.msra.mxu0 %v471
    %v473 = vand.u32 %v316, 4294901760
    %474 = vmatmul.f32.gmra.mxu0 %v473
    %v475 = vpop.f32.mrf.mxu0
    %v476 = vadd.f32 %v443, %v475
    %477 = vdwg.mxu0
    %478 = vmatpush.msra.mxu0 0.0
    %479 = vmatpush.msra.mxu0 0.0
    %480 = vmatpush.msra.mxu0 0.0
    %481 = vmatpush.msra.mxu0 0.0
    %482 = vmatpush.msra.mxu0 0.0
    %483 = vmatpush.msra.mxu0 0.0
    %484 = vmatpush.msra.mxu0 0.0
    %485 = vmatpush.msra.mxu0 0.0
    %486 = vmatpush.msra.mxu0 0.0
    %487 = vmatpush.msra.mxu0 0.0
    %488 = vmatpush.msra.mxu0 0.0
    %489 = vmatpush.msra.mxu0 0.0
    %v490 = vand.u32 %v310, 4294901760
    %491 = vmatpush.msra.mxu0 %v490
    %v492 = vand.u32 %v309, 4294901760
    %493 = vmatpush.msra.mxu0 %v492
    %v494 = vand.u32 %v308, 4294901760
    %495 = vmatpush.msra.mxu0 %v494
    %v496 = vand.u32 %v307, 4294901760
    %497 = vmatpush.msra.mxu0 %v496
    %v498 = vand.u32 %v316, 4294901760
    %499 = vmatmul.f32.gmra.mxu0 %v498
    %v500 = vpop.f32.mrf.mxu0
    %v501 = vadd.f32 %v476, %v500
    %502 = vdwg.mxu0
    %503 = vst [vmem:[#allocation3] sm:$0x1] %v501
    // Predicated region
    $region22: #{tpu_custom_call.1} parent=1 // pred_check
      _
    $region23: #{tpu_custom_call.1} parent=1 // pred_check_branch
      %505 = sbr.rel (0) target = $region25
    $region24: #{tpu_custom_call.1} parent=1 // pred_region
      %507 = vsyncadd [#allocation4], 0
      %s509 = sshll.u32 [#allocation3], 4
      %s510 = int_to_ptr.vmem [resolvable:$true] %s509
      %s511 = sshll.u32 %s5, 4
      %s512 = int_to_ptr.hbm [resolvable:$true] %s511
      %514 = dma.vmem_to_hbm [thread:$0]  %s510, 16, %s512, [#allocation4]
    $region25: #{tpu_custom_call.1} parent=1 // pred_fallthru
      _
    // Predicated region
    $region26: #{tpu_custom_call.1} parent=1 // pred_check
      _
    $region27: #{tpu_custom_call.1} parent=1 // pred_check_branch
      %516 = sbr.rel (0) target = $region29
    $region28: #{tpu_custom_call.1} parent=1 // pred_region
      %518 = dma.done [#allocation4], 16
    $region29: #{tpu_custom_call.1} parent=1 // pred_fallthru
      _
    %519 = vsyncpa [#allocation4], 1

</llo_original>
